<compile_context>
chip_gen: v7x
topology: tpu7x:2x2x1
jax: 0.10.0
libtpu: 0.0.40
codegen_flags: <defaults>
</compile_context>

<pallas_src>
import functools

import jax
import jax.numpy as jnp
from jax.experimental import pallas as pl
from jax.experimental.pallas import tpu as pltpu


def _conv3x3_matmul_kernel(w_ref, x_ref, o_ref):
    """One grid step: out tile (Cout, tile_m) = W (Cout, K) @ x_cols (K, tile_m).

    w_ref: (Cout, K)         folded 3x3 weights, VMEM-resident across the grid.
    x_ref: (1, K, tile_m)    im2col columns for this (batch, spatial-tile).
    o_ref: (1, Cout, tile_m) NCHW-flat output tile (spatial on lanes).
    """
    o_ref[0] = jnp.dot(
        w_ref[...], x_ref[0], preferred_element_type=jnp.float32
    ).astype(o_ref.dtype)


def _im2col_nchw(x, compute_dtype):
    """(B, Cin, H, W) -> (B, 9*Cin, H*W) with the padding=1 halo, tap-major K.

    x_cols[b, (dy*3+dx)*Cin + ci, y*W + x] = x_pad[b, ci, y+dy, x+dx].
    The cast to compute_dtype happens once here (fused into this pass by XLA).
    """
    b, cin, h, w = x.shape
    xp = jnp.pad(x.astype(compute_dtype), ((0, 0), (0, 0), (1, 1), (1, 1)))
    cols = [xp[:, :, dy:dy + h, dx:dx + w] for dy in range(3) for dx in range(3)]
    return jnp.concatenate(cols, axis=1).reshape(b, 9 * cin, h * w)


def _fold_weight(weight, compute_dtype):
    """PyTorch (Cout, Cin, 3, 3) -> (Cout, 9*Cin) matching _im2col_nchw's K order.

    NOTE: hoist to init time for repeated forward calls (avoids a per-call
    re-layout of the tiny weight tensor).
    """
    cout, cin, kh, kw = weight.shape
    w_mat = jnp.transpose(weight, (0, 2, 3, 1)).reshape(cout, kh * kw * cin)
    return w_mat.astype(compute_dtype)


@functools.partial(jax.jit, static_argnames=("compute_dtype", "tile_m"))
def overlap_patch_embed_forward(x, weight, *, compute_dtype=jnp.bfloat16,
                                tile_m=2048):
    """x: (B, Cin, H, W) NCHW; weight: (Cout, Cin, 3, 3) PyTorch layout.

    Returns Conv2d(kernel=3, stride=1, padding=1, bias=False)(x) in NCHW,
    shape (B, Cout, H, W), dtype = x.dtype.
    """
    bsz, cin, hgt, wdt = x.shape
    cout = weight.shape[0]
    assert weight.shape == (cout, cin, 3, 3)

    hw = hgt * wdt
    k = 9 * cin

    # Spatial tile = lane dim of both the input and output blocks.
    if tile_m >= hw:
        tile_m = hw                                  # full dim -> always legal
    else:
        tile_m = max(128, (tile_m // 128) * 128)     # keep the lane dim aligned
    num_m = pl.cdiv(hw, tile_m)                      # ragged tail is masked on
                                                     # the output writeback

    x_cols = _im2col_nchw(x, compute_dtype)          # (B, 9*Cin, H*W)
    w_mat = _fold_weight(weight, compute_dtype)      # (Cout, 9*Cin)

    out_itemsize = jnp.dtype(x.dtype).itemsize
    in_itemsize = jnp.dtype(compute_dtype).itemsize
    cost = pl.CostEstimate(
        flops=2 * bsz * hw * cout * k,
        transcendentals=0,
        bytes_accessed=(x_cols.size * in_itemsize
                        + w_mat.size * in_itemsize
                        + bsz * cout * hw * out_itemsize),
    )

    out_flat = pl.pallas_call(
        _conv3x3_matmul_kernel,
        out_shape=jax.ShapeDtypeStruct((bsz, cout, hw), x.dtype),
        grid_spec=pltpu.PrefetchScalarGridSpec(
            num_scalar_prefetch=0,
            grid=(bsz, num_m),
            in_specs=[
                # Folded weight: same block every step -> stays VMEM-resident.
                pl.BlockSpec((cout, k), lambda bi, mi: (0, 0)),
                # im2col columns: K on sublanes (full dim), spatial on lanes.
                pl.BlockSpec((1, k, tile_m), lambda bi, mi: (bi, 0, mi)),
            ],
            # Lane-dense NCHW-flat output tile.
            out_specs=pl.BlockSpec((1, cout, tile_m), lambda bi, mi: (bi, 0, mi)),
        ),
        compiler_params=pltpu.CompilerParams(
            dimension_semantics=("parallel", "parallel"),
        ),
        cost_estimate=cost,
    )(w_mat, x_cols)

    # (B, Cout, H*W) -> (B, Cout, H, W): contiguous split, free (no transpose).
    return out_flat.reshape(bsz, cout, hgt, wdt)


if __name__ == "__main__":
    key = jax.random.PRNGKey(0)
    B, C_IN, H, W = 2, 3, 16, 16
    EMBED_DIM = 48

    kx, kw = jax.random.split(key, 2)
    x = jax.random.normal(kx, (B, C_IN, H, W), dtype=jnp.float32)
    # Deterministic Conv2d weight (PyTorch layout (out, in, kh, kw), bias=False).
    bound = 1.0 / (C_IN * 3 * 3) ** 0.5
    weight = jax.random.uniform(kw, (EMBED_DIM, C_IN, 3, 3), jnp.float32,
                                -bound, bound)

    # Reference: plain XLA conv with PyTorch Conv2d semantics, full precision.
    y_ref = jax.lax.conv_general_dilated(
        x, weight, window_strides=(1, 1), padding=((1, 1), (1, 1)),
        dimension_numbers=("NCHW", "OIHW", "NCHW"),
        precision=jax.lax.Precision.HIGHEST)

    # f32 compute path.  Tolerance tightened vs. the previous 5e-2, but not to
    # 1e-5: Mosaic's default MXU precision for f32 operands may use reduced-
    # precision passes.  Structural/indexing bugs produce O(0.1-1) errors and
    # are still caught at 1e-2.
    y_f32 = jax.block_until_ready(
        overlap_patch_embed_forward(x, weight, compute_dtype=jnp.float32))
    assert y_f32.shape == y_ref.shape
    assert y_f32.dtype == y_ref.dtype
    assert jnp.allclose(y_f32, y_ref, atol=1e-2, rtol=1e-2), "f32 mismatch vs reference"

    # bf16 default path (MXU fast path on all generations; f32 accumulation).
    y_bf16 = jax.block_until_ready(overlap_patch_embed_forward(x, weight))
    assert y_bf16.shape == y_ref.shape
    assert jnp.allclose(y_bf16, y_ref, atol=5e-2, rtol=5e-2), "bf16 mismatch vs reference"

    print("KERNEL_OK")
</pallas_src>

<mosaic_0001>
module attributes {stable_mosaic.version = 11 : i64} {
  func.func @_conv3x3_matmul_kernel(%arg0: i32, %arg1: i32, %arg2: memref<48x27xf32, #tpu.memory_space<vmem>>, %arg3: memref<1x27x256xf32, #tpu.memory_space<vmem>>, %arg4: memref<1x48x256xf32, #tpu.memory_space<vmem>>) attributes {dimension_semantics = [#tpu.dimension_semantics<parallel>, #tpu.dimension_semantics<parallel>], iteration_bounds = array<i64: 2, 1>, scalar_prefetch = 0 : i64, scratch_operands = 0 : i64, tpu.core_type = #tpu.core_type<tc>, window_params = [{pipeline_mode = #tpu.pipeline_mode<synchronous>, transform_indices = @transform_0, window_bounds = array<i64: 48, 27>}, {transform_indices = @transform_1, window_bounds = array<i64: 1, 27, 256>}, {transform_indices = @transform_2, window_bounds = array<i64: 1, 48, 256>}]} {
    %c0 = arith.constant 0 : index
    %c0_0 = arith.constant 0 : index
    %0 = vector.load %arg2[%c0, %c0_0] : memref<48x27xf32, #tpu.memory_space<vmem>>, vector<48x27xf32>
    %c0_1 = arith.constant 0 : index
    %c0_2 = arith.constant 0 : index
    %c0_3 = arith.constant 0 : index
    %1 = vector.load %arg3[%c0_1, %c0_2, %c0_3] : memref<1x27x256xf32, #tpu.memory_space<vmem>>, vector<1x27x256xf32>
    %2 = vector.shape_cast %1 : vector<1x27x256xf32> to vector<27x256xf32>
    %cst = arith.constant dense<0.000000e+00> : vector<48x256xf32>
    %3 = tpu.matmul %0, %2, %cst {dimension_numbers = #tpu.dot_dimension_numbers<[1], [0], [0], [1], [0, 0, 1, 1], [], []>} : vector<48x27xf32>, vector<27x256xf32>, vector<48x256xf32> -> vector<48x256xf32>
    %c0_4 = arith.constant 0 : index
    %c0_5 = arith.constant 0 : index
    %c0_6 = arith.constant 0 : index
    %4 = vector.load %arg4[%c0_4, %c0_5, %c0_6] : memref<1x48x256xf32, #tpu.memory_space<vmem>>, vector<1x48x256xf32>
    %5 = vector.shape_cast %4 : vector<1x48x256xf32> to vector<48x256xf32>
    %6 = vector.shape_cast %3 : vector<48x256xf32> to vector<1x48x256xf32>
    tpu.vector_store %arg4[%c0_4, %c0_5, %c0_6], %6 {strides = array<i32>} : memref<1x48x256xf32, #tpu.memory_space<vmem>>, vector<1x48x256xf32>,
    return
  }
  func.func @transform_0(%arg0: i32, %arg1: i32) -> (i32, i32) {
    %c0_i32 = arith.constant 0 : i32
    %c0_i32_0 = arith.constant 0 : i32
    %c0_i32_1 = arith.constant 0 : i32
    return %c0_i32, %c0_i32_0 : i32, i32
  }
  func.func @transform_1(%arg0: i32, %arg1: i32) -> (i32, i32, i32) {
    %c0_i32 = arith.constant 0 : i32
    %c0_i32_0 = arith.constant 0 : i32
    return %arg0, %c0_i32, %arg1 : i32, i32, i32
  }
  func.func @transform_2(%arg0: i32, %arg1: i32) -> (i32, i32, i32) {
    %c0_i32 = arith.constant 0 : i32
    %c0_i32_0 = arith.constant 0 : i32
    return %arg0, %c0_i32, %arg1 : i32, i32, i32
  }
}

</mosaic_0001>

<llo_original>
// kernel: overlap_patch_embed_forward.1
$region0: #{overlap_patch_embed_forward.1}
  #allocation0 [shape = 'u32[]', space=smem, size = 0x4, offset = 0x4, fixed_abs, tag = 'smem constant byte address 0x4 - core index']
  #allocation1 [shape = 'u32[144,128]{1,0:T(1,128)}', space=vmem, size = 0x12000, scoped, tag = 'internal scratch']
  %s0 = inlined_call_operand.vmem [shape: f32[48,27], index: 0, kind: input, shape index: {}]
  %s1 = inlined_call_operand.vmem [shape: f32[2,27,256], index: 1, kind: input, shape index: {}]
  %s2 = inlined_call_operand.vmem [shape: f32[2,48,256], index: 2, kind: output, shape index: {}]
  %s3 = sld [smem:[#allocation0]]
  $region41: #{overlap_patch_embed_forward.1} parent=0
    _
  %s5 = ssub.s32 1, %s3
  %s6 = scalar_select 0, %s5, %s3
  loop: start=0, step=1, limit=4
  $region2: #{overlap_patch_embed_forward.1} parent=0 // loop_pre_header
    _
  $region3: #{overlap_patch_embed_forward.1} parent=0 // loop_header
    %s8 = sphi 0, %s12
    %p9 = scmp.ge.s32.totalorder %s8, 4
    %s15 = sphi 0, %s27
    %s16 = sphi 0, %s23
    %s17 = sphi 0, %s15
    %s18 = sphi 0, %s16
    %s19 = sphi 0, %s17
    %s20 = sphi 0, %s18
    %s28 = sphi 0, %s28
    %s30 = sphi 0, %s28
    %s31 = sphi 0, %s30
    %s45 = sphi 0, %s31
    %s53 = sphi 0, %s55
    %s56 = sphi 0, %s53
    %s57 = sphi 0, %s56
    %s73 = sphi 0, %s57
    %s81 = sphi 0, %s83
    %s84 = sphi 0, %s81
    %s85 = sphi 0, %s84
    %s101 = sphi 0, %s85
  $region4: #{overlap_patch_embed_forward.1} parent=0 // loop_header_branch
    %11 = sbr.rel (%p9) target = $region8
  $region5: #{overlap_patch_embed_forward.1} parent=0 // loop_body
    %s13 = ssub.s32 %s8, 1
    %s14 = ssub.s32 %s8, 2
    %s21 = sadd.s32 1, %s16
    %p22 = scmp.ge.s32.totalorder %s21, 1
    %s23 = scalar_select %p22, 0, %s21
    %s24 = sadd.s32 1, %s15
    %s25 = scalar_select %p22, %s24, %s15
    %p26 = scmp.ge.s32.totalorder %s25, 2
    %s27 = scalar_select %p26, 0, %s25
    %s29 = sadd.s32 %s28, 1
    %p32 = scmp.eq.s32.totalorder %s8, 1
    %p33 = scmp.ne.s32.totalorder %s28, %s30
    %p34 = scmp.eq.s32.totalorder %s8, 0
    %p35 = por %p33, %p34
    %p36 = scmp.ne.s32.totalorder %s28, %s30
    %p37 = scmp.eq.s32.totalorder %s13, 1
    %p38 = por %p36, %p37
    %p39 = scmp.ne.s32.totalorder %s30, %s31
    %p40 = scmp.eq.s32.totalorder %s13, 0
    %p41 = por %p39, %p40
    %p42 = scmp.ne.s32.totalorder %s30, %s31
    %p43 = scmp.eq.s32.totalorder %s14, 1
    %p44 = por %p42, %p43
    %p46 = scmp.ne.s32.totalorder %s31, %s45
    %p47 = scmp.eq.s32.totalorder %s14, 0
    %p48 = por %p46, %p47
    %s49 = ssub.s32 %s15, %s27
    %s50 = ssub.s32 %s16, %s23
    %s51 = sor.u32 %s49, %s50
    %p52 = scmp.eq.s32.totalorder %s51, 0
    %s54 = sadd.s32 %s53, 1
    %s55 = scalar_select %p52, %s53, %s54
    %p58 = pneg %p52
    %p59 = scmp.eq.s32.totalorder %s8, 1
    %p60 = por %p58, %p59
    %p61 = scmp.ne.s32.totalorder %s53, %s56
    %p62 = scmp.eq.s32.totalorder %s8, 0
    %p63 = por %p61, %p62
    %p64 = scmp.ne.s32.totalorder %s53, %s56
    %p65 = scmp.eq.s32.totalorder %s13, 1
    %p66 = por %p64, %p65
    %p67 = scmp.ne.s32.totalorder %s56, %s57
    %p68 = scmp.eq.s32.totalorder %s13, 0
    %p69 = por %p67, %p68
    %p70 = scmp.ne.s32.totalorder %s56, %s57
    %p71 = scmp.eq.s32.totalorder %s14, 1
    %p72 = por %p70, %p71
    %p74 = scmp.ne.s32.totalorder %s57, %s73
    %p75 = scmp.eq.s32.totalorder %s14, 0
    %p76 = por %p74, %p75
    %s77 = ssub.s32 %s15, %s27
    %s78 = ssub.s32 %s16, %s23
    %s79 = sor.u32 %s77, %s78
    %p80 = scmp.eq.s32.totalorder %s79, 0
    %s82 = sadd.s32 %s81, 1
    %s83 = scalar_select %p80, %s81, %s82
    %p86 = pneg %p80
    %p87 = scmp.eq.s32.totalorder %s8, 1
    %p88 = por %p86, %p87
    %p89 = scmp.ne.s32.totalorder %s81, %s84
    %p90 = scmp.eq.s32.totalorder %s8, 0
    %p91 = por %p89, %p90
    %p92 = scmp.ne.s32.totalorder %s81, %s84
    %p93 = scmp.eq.s32.totalorder %s13, 1
    %p94 = por %p92, %p93
    %p95 = scmp.ne.s32.totalorder %s84, %s85
    %p96 = scmp.eq.s32.totalorder %s13, 0
    %p97 = por %p95, %p96
    %p98 = scmp.ne.s32.totalorder %s84, %s85
    %p99 = scmp.eq.s32.totalorder %s14, 1
    %p100 = por %p98, %p99
    %p102 = scmp.ne.s32.totalorder %s85, %s101
    %p103 = scmp.eq.s32.totalorder %s14, 0
    %p104 = por %p102, %p103
    %p105 = scmp.le.s32.totalorder 1, %s8
    %p106 = scmp.lt.s32.totalorder %s8, 3
    %p107 = pnand %p105, %p106
    %p108 = pneg %p107
    // Predicated region
    $region9: #{overlap_patch_embed_forward.1} parent=5 // pred_check
      _
    $region10: #{overlap_patch_embed_forward.1} parent=5 // pred_check_branch
      %110 = sbr.rel (%p107) target = $region12
    $region11: #{overlap_patch_embed_forward.1} parent=5 // pred_region
      %s111 = ssub.s32 %s8, 1
      // Predicated region
      $region13: #{overlap_patch_embed_forward.1} parent=11 // pred_check
        %p112 = pneg %p41
      $region14: #{overlap_patch_embed_forward.1} parent=11 // pred_check_branch
        %114 = sbr.rel (%p112) target = $region16
      $region15: #{overlap_patch_embed_forward.1} parent=11 // pred_region
        _
      $region16: #{overlap_patch_embed_forward.1} parent=11 // pred_fallthru
        _
    $region12: #{overlap_patch_embed_forward.1} parent=5 // pred_fallthru
      _
    %p115 = scmp.lt.s32.totalorder %s8, 2
    // Predicated region
    $region17: #{overlap_patch_embed_forward.1} parent=5 // pred_check
      %p116 = pneg %p115
    $region18: #{overlap_patch_embed_forward.1} parent=5 // pred_check_branch
      %118 = sbr.rel (%p116) target = $region20
    $region19: #{overlap_patch_embed_forward.1} parent=5 // pred_region
      // Predicated region
      $region21: #{overlap_patch_embed_forward.1} parent=19 // pred_check
        %p119 = pneg %p63
      $region22: #{overlap_patch_embed_forward.1} parent=19 // pred_check_branch
        %121 = sbr.rel (%p119) target = $region24
      $region23: #{overlap_patch_embed_forward.1} parent=19 // pred_region
        %s122 = smul.u32 2, %s16
        %p123 = scmp.lt.s32.totalorder %s15, 1
        %s124 = scalar_select %p123, %s15, 1
        %p125 = scmp.lt.s32.totalorder %s122, 1
        %s126 = scalar_select %p125, %s122, 1
        %s127 = smul.addr %s124, 8
        %s128 = sadd.s32 %s126, %s127
        %s129 = smul.addr %s128, 8
        %s130 = scalar_lea.vmem %s1, %s129
        %s131 = smul.u32 2, %s16
      $region24: #{overlap_patch_embed_forward.1} parent=19 // pred_fallthru
        _
    $region20: #{overlap_patch_embed_forward.1} parent=5 // pred_fallthru
      _
    %p132 = scmp.le.s32.totalorder 1, %s8
    %p133 = scmp.lt.s32.totalorder %s8, 3
    %p134 = pnand %p132, %p133
    %p135 = pneg %p134
    // Predicated region
    $region25: #{overlap_patch_embed_forward.1} parent=5 // pred_check
      _
    $region26: #{overlap_patch_embed_forward.1} parent=5 // pred_check_branch
      %137 = sbr.rel (%p134) target = $region28
    $region27: #{overlap_patch_embed_forward.1} parent=5 // pred_region
      %s138 = ssub.s32 %s8, 1
      %p139 = pneg %p41
      %p140 = pneg %p38
      %s141 = smul.u32 2, %s18
      %p142 = scmp.lt.s32.totalorder %s17, 1
      %s143 = scalar_select %p142, %s17, 1
      %p144 = scmp.lt.s32.totalorder %s141, 1
      %s145 = scalar_select %p144, %s141, 1
      %s146 = smul.addr %s143, 8
      %s147 = sadd.s32 %s145, %s146
      %s148 = smul.addr %s147, 8
      %s149 = scalar_lea.vmem %s1, %s148
      %p150 = pneg %p69
      %p151 = pneg %p66
      %p152 = pneg %p97
      %p153 = pneg %p94
      %s154 = smul.u32 2, %s18
      %p155 = scmp.lt.s32.totalorder %s17, 1
      %s156 = scalar_select %p155, %s17, 1
      %p157 = scmp.lt.s32.totalorder %s154, 1
      %s158 = scalar_select %p157, %s154, 1
      %s159 = smul.addr %s156, 12
      %s160 = sadd.s32 %s158, %s159
      %s161 = smul.addr %s160, 8
      %s162 = scalar_lea.vmem %s2, %s161
      %s163 = smul.u32 2, %s18
      %p164 = scmp.lt.s32.totalorder %s17, 1
      %s165 = scalar_select %p164, %s17, 1
      %p166 = scmp.lt.s32.totalorder %s163, 1
      %s167 = scalar_select %p166, %s163, 1
      %s168 = smul.addr %s165, 8
      %s169 = sadd.s32 %s167, %s168
      %s170 = smul.addr %s169, 8
      %s171 = scalar_lea.vmem %s1, %s170
      %s172 = smul.u32 2, %s18
      %s173 = smul.u32 2, %s18
      %p174 = scmp.lt.s32.totalorder %s17, 1
      %s175 = scalar_select %p174, %s17, 1
      %p176 = scmp.lt.s32.totalorder %s173, 1
      %s177 = scalar_select %p176, %s173, 1
      %s178 = smul.addr %s175, 12
      %s179 = sadd.s32 %s177, %s178
      %s180 = smul.addr %s179, 8
      %s181 = scalar_lea.vmem %s2, %s180
      %s182 = smul.u32 2, %s18
      %v183 = vld [vmem:[%s0] sm:$0xff]
      %v184 = vld [vmem:[%s0 + $0x8] sm:$0xff]
      %v185 = vld [vmem:[%s0 + $0x10] sm:$0xff]
      %v186 = vld [vmem:[%s0 + $0x18] sm:$0xff]
      %v187 = vld [vmem:[%s0 + $0x20] sm:$0xff]
      %v188 = vld [vmem:[%s0 + $0x28] sm:$0xff]
      %v189 = vld [vmem:[%s171] sm:$0xff]
      %v190 = vld [vmem:[%s171 + $0x8] sm:$0xff]
      %v191 = vld [vmem:[%s171 + $0x10] sm:$0xff]
      %v192 = vld [vmem:[%s171 + $0x18] sm:$0xff]
      %v193 = vld [vmem:[%s171 + $0x20] sm:$0xff]
      %v194 = vld [vmem:[%s171 + $0x28] sm:$0xff]
      %v195 = vld [vmem:[%s171 + $0x30] sm:$0x7]
      %v196 = vld [vmem:[%s171 + $0x38] sm:$0x7]
      %vm197 = vcmask 220160
      %v199 = vsel %vm197, %v183, 0
      %v202 = vsel %vm197, %v184, 0
      %v205 = vsel %vm197, %v185, 0
      %v208 = vsel %vm197, %v186, 0
      %v211 = vsel %vm197, %v187, 0
      %v214 = vsel %vm197, %v188, 0
      %vm216 = vcmask 1042432
      %v218 = vsel %vm216, %v195, 0
      %v221 = vsel %vm216, %v196, 0
      %223 = vmatprep.subr.mxu0 %v190
      %224 = vmatpush1.msra.mxu0 %v189
      %225 = vmatprep.subr.mxu0 %v192
      %226 = vmatpush1.msra.mxu0 %v191
      %227 = vmatprep.subr.mxu0 %v194
      %228 = vmatpush1.msra.mxu0 %v193
      %229 = vmatprep.subr.mxu0 %v221
      %230 = vmatpush1.msra.mxu0 %v218
      %231 = vmatprep.subr.mxu0 0.0
      %232 = vmatpush1.msra.mxu0 0.0
      %233 = vmatprep.subr.mxu0 0.0
      %234 = vmatpush1.msra.mxu0 0.0
      %235 = vmatprep.subr.mxu0 0.0
      %236 = vmatpush1.msra.mxu0 0.0
      %237 = vmatprep.subr.mxu0 0.0
      %238 = vmatpush1.msra.mxu0 0.0
      %239 = vmatprep.subr.mxu0 0.0
      %240 = vmatpush1.msra.mxu0 0.0
      %241 = vmatprep.subr.mxu0 0.0
      %242 = vmatpush1.msra.mxu0 0.0
      %243 = vmatprep.subr.mxu0 0.0
      %244 = vmatpush1.msra.mxu0 0.0
      %245 = vmatprep.subr.mxu0 0.0
      %246 = vmatpush1.msra.mxu0 0.0
      %247 = vmatprep.subr.mxu0 0.0
      %248 = vmatpush1.msra.mxu0 0.0
      %249 = vmatprep.subr.mxu0 0.0
      %250 = vmatpush1.msra.mxu0 0.0
      %251 = vmatprep.subr.mxu0 0.0
      %252 = vmatpush1.msra.mxu0 0.0
      %253 = vmatprep.subr.mxu0 0.0
      %254 = vmatpush1.msra.mxu0 0.0
      %255 = vmatprep.subr.mxu0 0.0
      %256 = vmatpush1.msra.mxu0 0.0
      %257 = vmatprep.subr.mxu0 0.0
      %258 = vmatpush1.msra.mxu0 0.0
      %259 = vmatprep.subr.mxu0 0.0
      %260 = vmatpush1.msra.mxu0 0.0
      %261 = vmatprep.subr.mxu0 0.0
      %262 = vmatpush1.msra.mxu0 0.0
      %263 = vmatprep.subr.mxu0 0.0
      %264 = vmatpush1.msra.mxu0 0.0
      %265 = vmatprep.subr.mxu0 0.0
      %266 = vmatpush1.msra.mxu0 0.0
      %267 = vmatprep.subr.mxu0 0.0
      %268 = vmatpush1.msra.mxu0 0.0
      %269 = vmatprep.subr.mxu0 0.0
      %270 = vmatpush1.msra.mxu0 0.0
      %271 = vmatprep.subr.mxu0 0.0
      %272 = vmatpush1.msra.mxu0 0.0
      %273 = vmatprep.subr.mxu0 0.0
      %274 = vmatpush1.msra.mxu0 0.0
      %275 = vmatprep.subr.mxu0 0.0
      %276 = vmatpush1.msra.mxu0 0.0
      %277 = vmatprep.subr.mxu0 0.0
      %278 = vmatpush1.msra.mxu0 0.0
      %279 = vmatprep.subr.mxu0 0.0
      %280 = vmatpush1.msra.mxu0 0.0
      %281 = vmatprep.subr.mxu0 0.0
      %282 = vmatpush1.msra.mxu0 0.0
      %283 = vmatprep.subr.mxu0 0.0
      %284 = vmatpush1.msra.mxu0 0.0
      %285 = vmatprep.subr.mxu0 0.0
      %286 = vmatpush1.msra.mxu0 0.0
      %287 = vmatprep.mubr.f32.mxu0 0.0
      %288 = vmatmul.mubr.f32.gmra.mrb[0].mxu0 %v199
      %v289 = vpop.f32.mrb[0].mxu0
      %v290 = vadd.f32 0.0, %v289
      %v291 = vpop.f32.mrb[0].mxu0
      %v292 = vadd.f32 0.0, %v291
      %293 = vmatprep.mubr.f32.mxu0 0.0
      %294 = vmatmul.mubr.f32.gmra.mrb[0].mxu0 %v202
      %v295 = vpop.f32.mrb[0].mxu0
      %v296 = vadd.f32 0.0, %v295
      %v297 = vpop.f32.mrb[0].mxu0
      %v298 = vadd.f32 0.0, %v297
      %299 = vmatprep.mubr.f32.mxu0 0.0
      %300 = vmatmul.mubr.f32.gmra.mrb[0].mxu0 %v205
      %v301 = vpop.f32.mrb[0].mxu0
      %v302 = vadd.f32 0.0, %v301
      %v303 = vpop.f32.mrb[0].mxu0
      %v304 = vadd.f32 0.0, %v303
      %305 = vmatprep.mubr.f32.mxu0 0.0
      %306 = vmatmul.mubr.f32.gmra.mrb[0].mxu0 %v208
      %v307 = vpop.f32.mrb[0].mxu0
      %v308 = vadd.f32 0.0, %v307
      %v309 = vpop.f32.mrb[0].mxu0
      %v310 = vadd.f32 0.0, %v309
      %311 = vmatprep.mubr.f32.mxu0 0.0
      %312 = vmatmul.mubr.f32.gmra.mrb[0].mxu0 %v211
      %v313 = vpop.f32.mrb[0].mxu0
      %v314 = vadd.f32 0.0, %v313
      %v315 = vpop.f32.mrb[0].mxu0
      %v316 = vadd.f32 0.0, %v315
      %317 = vmatprep.mubr.f32.mxu0 0.0
      %318 = vmatmul.mubr.f32.gmra.mrb[0].mxu0 %v214
      %v319 = vpop.f32.mrb[0].mxu0
      %v320 = vadd.f32 0.0, %v319
      %v321 = vpop.f32.mrb[0].mxu0
      %v322 = vadd.f32 0.0, %v321
      %323 = vdwg.mxu0
      %324 = vst [vmem:[%s181] sm:$0xff] %v290
      %325 = vst [vmem:[%s181 + $0x8] sm:$0xff] %v292
      %326 = vst [vmem:[%s181 + $0x10] sm:$0xff] %v296
      %327 = vst [vmem:[%s181 + $0x18] sm:$0xff] %v298
      %328 = vst [vmem:[%s181 + $0x20] sm:$0xff] %v302
      %329 = vst [vmem:[%s181 + $0x28] sm:$0xff] %v304
      %330 = vst [vmem:[%s181 + $0x30] sm:$0xff] %v308
      %331 = vst [vmem:[%s181 + $0x38] sm:$0xff] %v310
      %332 = vst [vmem:[%s181 + $0x40] sm:$0xff] %v314
      %333 = vst [vmem:[%s181 + $0x48] sm:$0xff] %v316
      %334 = vst [vmem:[%s181 + $0x50] sm:$0xff] %v320
      %335 = vst [vmem:[%s181 + $0x58] sm:$0xff] %v322
      %s336 = smul.u32 2, %s18
      %p337 = scmp.lt.s32.totalorder %s17, 1
      %s338 = scalar_select %p337, %s17, 1
      %p339 = scmp.lt.s32.totalorder %s336, 1
      %s340 = scalar_select %p339, %s336, 1
      %s341 = smul.addr %s338, 12
      %s342 = sadd.s32 %s340, %s341
      %s343 = smul.addr %s342, 8
      %s344 = scalar_lea.vmem %s2, %s343
      // Predicated region
      $region29: #{overlap_patch_embed_forward.1} parent=27 // pred_check
        %p345 = pneg %p94
      $region30: #{overlap_patch_embed_forward.1} parent=27 // pred_check_branch
        %347 = sbr.rel (%p345) target = $region32
      $region31: #{overlap_patch_embed_forward.1} parent=27 // pred_region
        %s348 = smul.u32 2, %s18
      $region32: #{overlap_patch_embed_forward.1} parent=27 // pred_fallthru
        _
    $region28: #{overlap_patch_embed_forward.1} parent=5 // pred_fallthru
      _
    %p349 = scmp.le.s32.totalorder 2, %s8
    // Predicated region
    $region33: #{overlap_patch_embed_forward.1} parent=5 // pred_check
      %p350 = pneg %p349
    $region34: #{overlap_patch_embed_forward.1} parent=5 // pred_check_branch
      %352 = sbr.rel (%p350) target = $region36
    $region35: #{overlap_patch_embed_forward.1} parent=5 // pred_region
      %s353 = ssub.s32 %s8, 2
      // Predicated region
      $region37: #{overlap_patch_embed_forward.1} parent=35 // pred_check
        %p354 = pneg %p100
      $region38: #{overlap_patch_embed_forward.1} parent=35 // pred_check_branch
        %356 = sbr.rel (%p354) target = $region40
      $region39: #{overlap_patch_embed_forward.1} parent=35 // pred_region
        %s357 = smul.u32 2, %s20
        %p358 = scmp.lt.s32.totalorder %s19, 1
        %s359 = scalar_select %p358, %s19, 1
        %p360 = scmp.lt.s32.totalorder %s357, 1
        %s361 = scalar_select %p360, %s357, 1
        %s362 = smul.addr %s359, 12
        %s363 = sadd.s32 %s361, %s362
        %s364 = smul.addr %s363, 8
        %s365 = scalar_lea.vmem %s2, %s364
      $region40: #{overlap_patch_embed_forward.1} parent=35 // pred_fallthru
        _
    $region36: #{overlap_patch_embed_forward.1} parent=5 // pred_fallthru
      _
  $region6: #{overlap_patch_embed_forward.1} parent=0 // loop_footer
    %s12 = sadd.s32 1, %s8
  $region7: #{overlap_patch_embed_forward.1} parent=0 // loop_footer_branch
    %7 = sbr.rel target = $region3
  $region8: #{overlap_patch_embed_forward.1} parent=0 // loop_exit
    _

</llo_original>
